<compile_context>
chip_gen: v5e
topology: v5e:2x2
jax: 0.10.0
libtpu: 0.0.40
codegen_flags: <defaults>
</compile_context>

<pallas_src>
import functools

import jax
import jax.numpy as jnp
from jax.experimental import pallas as pl
from jax.experimental.pallas import tpu as pltpu


def _round_up(x, m):
    return ((x + m - 1) // m) * m


def _vmem_capacity_bytes():
    try:
        return int(pltpu.get_tpu_info().vmem_capacity_bytes)
    except Exception:
        return 64 << 20  # conservative fallback (v7x per-TC VMEM)


def _plan_tiles(m, d, *, tc_target=512, tm_hard_cap=1 << 16):
    """Pick (row tile tm, row chunk tc, chunks per tile, vmem limit).

    tm is sized from the real (lane-padded) VMEM footprint of the double-buffered
    x tile plus the double-buffered lane-dense (1, tm) output tile, against a
    generation-aware budget; tc bounds vreg pressure of the (tc, 64) hidden
    activation inside a tile.
    """
    d_pad = _round_up(d, 128)                    # f32 minor dim pads to 128 lanes in VMEM
    tc = max(8, min(tc_target, _round_up(m, 8))) # chunk rows (multiple of 8)
    cap = _vmem_capacity_bytes()
    usable = int(cap * 0.45)                     # headroom for Mosaic internal scratch
    # Per row: 2x buffered x tile (lane padded) + 2x buffered (1, tm) output tile
    # (8-sublane padded).
    per_row = 2 * d_pad * 4 + 2 * 8 * 4
    fixed = tc * 128 * 4 + (2 << 20)             # hidden activation + weights + slack
    tm_cap = max(tc, ((usable - fixed) // per_row) // tc * tc)
    tm_cap = min(tm_cap, max(tc, (tm_hard_cap // tc) * tc))
    tm = min(tm_cap, _round_up(m, tc))
    # Keep >= 2 row tiles when there is enough work so the "parallel" grid axis can
    # feed both TensorCores on v7x.
    if m > 2 * tc and tm >= _round_up(m, tc):
        tm = max(tc, _round_up(pl.cdiv(m, 2), tc))
    n_chunks = tm // tc
    vmem_limit = min(int(cap * 0.7), usable + (16 << 20))
    return tm, tc, n_chunks, vmem_limit


def _quality_kernel(x_ref, w1_ref, b1_ref, w2_ref, b2_ref, local_ref, *, tc, n_chunks):
    """One row tile: (tm, D) -> lane-dense local quality (1, tm)."""
    w1 = w1_ref[...]          # (D, H)  VMEM resident
    b1 = b1_ref[...]          # (1, H)
    w2 = w2_ref[...]          # (1, H)  row vector for the VPU mul + lane reduce
    b2 = b2_ref[...]          # (1, 1)

    def chunk(start):
        x_c = x_ref[pl.ds(start, tc), :]                                # (tc, D)
        h = jnp.dot(x_c, w1, preferred_element_type=jnp.float32) + b1   # MXU, (tc, H)
        h = jnp.maximum(h, 0.0)                                         # ReLU (VPU)
        y = jnp.sum(h * w2, axis=-1, keepdims=True) + b2                # VPU + XLU, (tc, 1)
        q = jax.nn.sigmoid(y)                                           # EUP
        # sublane -> lane relayout (XLU slot is idle here) => lane-dense store.
        local_ref[:, pl.ds(start, tc)] = jnp.transpose(q).astype(local_ref.dtype)

    if n_chunks == 1:
        chunk(0)
    else:
        def body(c, carry):
            chunk(pl.multiple_of(c * tc, tc))
            return carry

        jax.lax.fori_loop(0, n_chunks, body, 0,
                          unroll=True if n_chunks <= 8 else 2)


def hierarchical_quality_assessor(x, params):
    """x: (..., input_dim) float32. Returns dict like the torch module."""
    w1, b1, w2, b2 = params["w1"], params["b1"], params["w2"], params["b2"]
    lead = x.shape[:-1]
    D = x.shape[-1]
    H = w1.shape[1]
    M = 1
    for s in lead:
        M *= s

    x2d = x.reshape(M, D).astype(jnp.float32)
    w1_f = w1.astype(jnp.float32)
    b1_row = b1.reshape(1, H).astype(jnp.float32)
    w2_row = w2.reshape(1, H).astype(jnp.float32)
    b2_11 = b2.reshape(1, 1).astype(jnp.float32)

    tm, tc, n_chunks, vmem_limit = _plan_tiles(M, D)
    num_tiles = pl.cdiv(M, tm)

    kernel = functools.partial(_quality_kernel, tc=tc, n_chunks=n_chunks)

    cost = pl.CostEstimate(
        flops=2 * M * D * H + 2 * M * H,
        transcendentals=2 * M,  # sigmoid ~ exp + reciprocal per row
        bytes_accessed=(M * D + M + D * H + 2 * H + 1) * 4,
    )

    local_tiles = pl.pallas_call(
        kernel,
        out_shape=jax.ShapeDtypeStruct((num_tiles, 1, tm), jnp.float32),
        grid_spec=pltpu.PrefetchScalarGridSpec(
            num_scalar_prefetch=0,
            grid=(num_tiles,),
            in_specs=[
                pl.BlockSpec((tm, D), lambda i: (i, 0)),   # x row tile (pipelined)
                pl.BlockSpec((D, H), lambda i: (0, 0)),    # w1, VMEM resident
                pl.BlockSpec((1, H), lambda i: (0, 0)),    # b1, resident
                pl.BlockSpec((1, H), lambda i: (0, 0)),    # w2 row, resident
                pl.BlockSpec((1, 1), lambda i: (0, 0)),    # b2, resident
            ],
            out_specs=pl.BlockSpec((None, 1, tm), lambda i: (i, 0, 0)),  # lane-dense
        ),
        compiler_params=pltpu.CompilerParams(
            dimension_semantics=("parallel",),     # row tiles are independent
            vmem_limit_bytes=vmem_limit,
        ),
        cost_estimate=cost,
    )(x2d, w1_f, b1_row, w2_row, b2_11)

    # Ragged last tile: padded rows hold sigmoid(garbage) and are sliced off here.
    local_flat = local_tiles.reshape(num_tiles * tm)[:M]
    return {
        "local_quality": local_flat.reshape(*lead, 1),
        "global_quality": local_flat.mean(),
    }


def init_params(key, input_dim, hidden=64):
    # Deterministic init mimicking nn.Linear's U(-1/sqrt(fan_in), 1/sqrt(fan_in)).
    k1, k2, k3, k4 = jax.random.split(key, 4)
    lim1 = 1.0 / jnp.sqrt(input_dim)
    lim2 = 1.0 / jnp.sqrt(hidden)
    return {
        "w1": jax.random.uniform(k1, (input_dim, hidden), jnp.float32, -lim1, lim1),
        "b1": jax.random.uniform(k2, (1, hidden), jnp.float32, -lim1, lim1),
        "w2": jax.random.uniform(k3, (hidden, 1), jnp.float32, -lim2, lim2),
        "b2": jax.random.uniform(k4, (1, 1), jnp.float32, -lim2, lim2),
    }


if __name__ == "__main__":
    key = jax.random.PRNGKey(0)
    k_x, k_p = jax.random.split(key)

    batch, seq, input_dim = 2, 8, 32
    x = jax.random.normal(k_x, (batch, seq, input_dim), jnp.float32)
    params = init_params(k_p, input_dim)

    out = hierarchical_quality_assessor(x, params)
    jax.block_until_ready(out)

    # Cross-check against a plain-JAX reference of the same math (full-f32 dots).
    hp = jax.lax.Precision.HIGHEST
    h_ref = jnp.maximum(
        jnp.dot(x.reshape(-1, input_dim), params["w1"], precision=hp)
        + params["b1"].reshape(1, -1), 0.0)
    lq_ref = jax.nn.sigmoid(
        jnp.dot(h_ref, params["w2"], precision=hp)
        + params["b2"].reshape(1, 1)).reshape(batch, seq, 1)
    gq_ref = lq_ref.mean()

    assert out["local_quality"].shape == (batch, seq, 1)
    assert out["global_quality"].shape == ()
    assert jnp.allclose(out["local_quality"], lq_ref, atol=1e-5, rtol=1e-5)
    assert jnp.allclose(out["global_quality"], gq_ref, atol=1e-5, rtol=1e-5)

    print("KERNEL_OK")
</pallas_src>

<mosaic_0001>
module attributes {stable_mosaic.version = 11 : i64} {
  func.func @_quality_kernel(%arg0: i32, %arg1: memref<16x32xf32, #tpu.memory_space<vmem>>, %arg2: memref<32x64xf32, #tpu.memory_space<vmem>>, %arg3: memref<1x64xf32, #tpu.memory_space<vmem>>, %arg4: memref<1x64xf32, #tpu.memory_space<vmem>>, %arg5: memref<1x1xf32, #tpu.memory_space<vmem>>, %arg6: memref<1x1x16xf32, #tpu.memory_space<vmem>>) attributes {dimension_semantics = [#tpu.dimension_semantics<parallel>], iteration_bounds = array<i64: 1>, scalar_prefetch = 0 : i64, scratch_operands = 0 : i64, tpu.core_type = #tpu.core_type<tc>, window_params = [{transform_indices = @transform_0, window_bounds = array<i64: 16, 32>}, {pipeline_mode = #tpu.pipeline_mode<synchronous>, transform_indices = @transform_1, window_bounds = array<i64: 32, 64>}, {pipeline_mode = #tpu.pipeline_mode<synchronous>, transform_indices = @transform_2, window_bounds = array<i64: 1, 64>}, {pipeline_mode = #tpu.pipeline_mode<synchronous>, transform_indices = @transform_3, window_bounds = array<i64: 1, 64>}, {pipeline_mode = #tpu.pipeline_mode<synchronous>, transform_indices = @transform_4, window_bounds = array<i64: 1, 1>}, {transform_indices = @transform_5, window_bounds = array<i64: 1, 1, 16>}]} {
    %c0 = arith.constant 0 : index
    %c0_0 = arith.constant 0 : index
    %0 = vector.load %arg2[%c0, %c0_0] : memref<32x64xf32, #tpu.memory_space<vmem>>, vector<32x64xf32>
    %c0_1 = arith.constant 0 : index
    %c0_2 = arith.constant 0 : index
    %1 = vector.load %arg3[%c0_1, %c0_2] : memref<1x64xf32, #tpu.memory_space<vmem>>, vector<1x64xf32>
    %c0_3 = arith.constant 0 : index
    %c0_4 = arith.constant 0 : index
    %2 = vector.load %arg4[%c0_3, %c0_4] : memref<1x64xf32, #tpu.memory_space<vmem>>, vector<1x64xf32>
    %c0_5 = arith.constant 0 : index
    %c0_6 = arith.constant 0 : index
    %3 = vector.load %arg5[%c0_5, %c0_6] : memref<1x1xf32, #tpu.memory_space<vmem>>, vector<1x1xf32>
    %c0_7 = arith.constant 0 : index
    %c0_8 = arith.constant 0 : index
    %4 = vector.load %arg1[%c0_7, %c0_8] : memref<16x32xf32, #tpu.memory_space<vmem>>, vector<16x32xf32>
    %cst = arith.constant dense<0.000000e+00> : vector<16x64xf32>
    %5 = tpu.matmul %4, %0, %cst {dimension_numbers = #tpu.dot_dimension_numbers<[1], [0], [0], [1], [0, 0, 1, 1], [], []>} : vector<16x32xf32>, vector<32x64xf32>, vector<16x64xf32> -> vector<16x64xf32>
    %6 = vector.broadcast %1 : vector<1x64xf32> to vector<16x64xf32>
    %7 = arith.addf %5, %6 : vector<16x64xf32>
    %cst_9 = arith.constant 0.000000e+00 : f32
    %8 = vector.broadcast %cst_9 : f32 to vector<16x64xf32>
    %9 = arith.maximumf %7, %8 : vector<16x64xf32>
    %10 = vector.broadcast %2 : vector<1x64xf32> to vector<16x64xf32>
    %11 = arith.mulf %9, %10 : vector<16x64xf32>
    %cst_10 = arith.constant dense<0.000000e+00> : vector<16xf32>
    %12 = vector.multi_reduction <add>, %11, %cst_10 [1] : vector<16x64xf32> to vector<16xf32>
    %13 = vector.shape_cast %12 : vector<16xf32> to vector<16x1xf32>
    %14 = vector.broadcast %3 : vector<1x1xf32> to vector<16x1xf32>
    %15 = arith.addf %13, %14 : vector<16x1xf32>
    %16 = arith.negf %15 : vector<16x1xf32>
    %17 = math.exp %16 : vector<16x1xf32>
    %cst_11 = arith.constant 1.000000e+00 : f32
    %18 = vector.broadcast %cst_11 : f32 to vector<16x1xf32>
    %19 = arith.addf %18, %17 : vector<16x1xf32>
    %20 = arith.divf %18, %19 : vector<16x1xf32>
    %21 = tpu.transpose %20, [1, 0] : vector<16x1xf32> -> vector<1x16xf32>
    %c0_12 = arith.constant 0 : index
    %c0_13 = arith.constant 0 : index
    %c0_14 = arith.constant 0 : index
    %22 = vector.load %arg6[%c0_12, %c0_13, %c0_14] : memref<1x1x16xf32, #tpu.memory_space<vmem>>, vector<1x1x16xf32>
    %23 = vector.shape_cast %22 : vector<1x1x16xf32> to vector<1x16xf32>
    %24 = vector.shape_cast %21 : vector<1x16xf32> to vector<1x1x16xf32>
    tpu.vector_store %arg6[%c0_12, %c0_13, %c0_14], %24 {strides = array<i32>} : memref<1x1x16xf32, #tpu.memory_space<vmem>>, vector<1x1x16xf32>,
    return
  }
  func.func @transform_0(%arg0: i32) -> (i32, i32) {
    %c0_i32 = arith.constant 0 : i32
    %c0_i32_0 = arith.constant 0 : i32
    return %arg0, %c0_i32 : i32, i32
  }
  func.func @transform_1(%arg0: i32) -> (i32, i32) {
    %c0_i32 = arith.constant 0 : i32
    %c0_i32_0 = arith.constant 0 : i32
    %c0_i32_1 = arith.constant 0 : i32
    return %c0_i32, %c0_i32_0 : i32, i32
  }
  func.func @transform_2(%arg0: i32) -> (i32, i32) {
    %c0_i32 = arith.constant 0 : i32
    %c0_i32_0 = arith.constant 0 : i32
    %c0_i32_1 = arith.constant 0 : i32
    return %c0_i32, %c0_i32_0 : i32, i32
  }
  func.func @transform_3(%arg0: i32) -> (i32, i32) {
    %c0_i32 = arith.constant 0 : i32
    %c0_i32_0 = arith.constant 0 : i32
    %c0_i32_1 = arith.constant 0 : i32
    return %c0_i32, %c0_i32_0 : i32, i32
  }
  func.func @transform_4(%arg0: i32) -> (i32, i32) {
    %c0_i32 = arith.constant 0 : i32
    %c0_i32_0 = arith.constant 0 : i32
    %c0_i32_1 = arith.constant 0 : i32
    return %c0_i32, %c0_i32_0 : i32, i32
  }
  func.func @transform_5(%arg0: i32) -> (i32, i32, i32) {
    %c0_i32 = arith.constant 0 : i32
    %c0_i32_0 = arith.constant 0 : i32
    %c0_i32_1 = arith.constant 0 : i32
    return %arg0, %c0_i32, %c0_i32_0 : i32, i32, i32
  }
}

</mosaic_0001>

<llo_original>
// kernel: tpu_custom_call.1
$region0: #{tpu_custom_call.1}
  #allocation0 [shape = 'u32[]', space=smem, size = 0x4, offset = 0x4, fixed_abs, tag = 'smem constant byte address 0x4 - core index']
  #allocation1 [shape = 'u32[72,128]{1,0:T(1,128)}', space=vmem, size = 0x9000, scoped, tag = 'internal scratch']
  #allocation2 [shape = 'f32[1,1]{1,0:T(1,128)S(1)}', space=vmem, size = 0x200, scoped, tag = 'scoped memory for tpu_custom_call.1']
  %s0 = inlined_call_operand.hbm [shape: f32[16,32], index: 0, kind: input, shape index: {}]
  %s1 = inlined_call_operand.hbm [shape: f32[32,64], index: 1, kind: input, shape index: {}]
  %s2 = inlined_call_operand.vmem [shape: f32[1,64], index: 2, kind: input, shape index: {}]
  %s3 = inlined_call_operand.vmem [shape: f32[1,64], index: 3, kind: input, shape index: {}]
  %s4 = inlined_call_operand.<no memory space> [shape: f32[1,1], index: 4, kind: input, shape index: {}]
  %s5 = inlined_call_operand.hbm [shape: f32[1,1,16], index: 5, kind: output, shape index: {}]
  %s6 = sld [smem:[#allocation0]]
  $region38: #{tpu_custom_call.1} parent=0
    _
  %s8 = ssub.s32 1, %s6
  %s9 = scalar_select 0, %s8, %s6
  %v10 = vstv %s4
  %11 = vst [vmem:[#allocation2] sm:$0x1] %v10
  $region1: #{tpu_custom_call.1} parent=0
    #allocation3 [shape = 'u8[8192]{0}', space=vmem, size = 0x2000, scoped, tag = 'input window, operand 0, single buffered']
    #allocation4 [shape = 's32[1]{0}', space=sflag, size = 0x4, scoped, tag = 'scoped memory for tpu_custom_call.1']
    #allocation5 [shape = 's32[1]{0}', space=sflag, size = 0x4, scoped, tag = 'scoped memory for tpu_custom_call.1']
    #allocation6 [shape = 'u8[16384]{0}', space=vmem, size = 0x4000, scoped, tag = 'input window, operand 1, single buffered']
    #allocation7 [shape = 's32[1]{0}', space=sflag, size = 0x4, scoped, tag = 'scoped memory for tpu_custom_call.1']
    #allocation8 [shape = 'u8[512]{0}', space=vmem, size = 0x400, scoped, tag = 'output window, operand 0, single buffered']
    %12 = vsyncpa [#allocation4], 0
    %13 = vsyncpa [#allocation7], 0
    %14 = vsyncpa [#allocation5], 0
    // Predicated region
    $region2: #{tpu_custom_call.1} parent=1 // pred_check
      _
    $region3: #{tpu_custom_call.1} parent=1 // pred_check_branch
      %16 = sbr.rel (0) target = $region5
    $region4: #{tpu_custom_call.1} parent=1 // pred_region
      %18 = vsyncadd [#allocation4], 0
      %s19 = sshll.u32 %s0, 4
      %s20 = int_to_ptr.hbm [resolvable:$true] %s19
      %s21 = sshll.u32 [#allocation3], 4
      %s22 = int_to_ptr.vmem [resolvable:$true] %s21
      %27 = dma.hbm_to_vmem [thread:$0]  %s20, 256, %s22, [#allocation4], 128, 128, 8
    $region5: #{tpu_custom_call.1} parent=1 // pred_fallthru
      _
    // Predicated region
    $region6: #{tpu_custom_call.1} parent=1 // pred_check
      _
    $region7: #{tpu_custom_call.1} parent=1 // pred_check_branch
      %29 = sbr.rel (0) target = $region9
    $region8: #{tpu_custom_call.1} parent=1 // pred_region
      %31 = vsyncadd [#allocation7], 0
      %s32 = sshll.u32 %s1, 4
      %s33 = int_to_ptr.hbm [resolvable:$true] %s32
      %s34 = sshll.u32 [#allocation6], 4
      %s35 = int_to_ptr.vmem [resolvable:$true] %s34
      %40 = dma.hbm_to_vmem [thread:$0]  %s33, 512, %s35, [#allocation7], 128, 128, 8
    $region9: #{tpu_custom_call.1} parent=1 // pred_fallthru
      _
    // Predicated region
    $region10: #{tpu_custom_call.1} parent=1 // pred_check
      _
    $region11: #{tpu_custom_call.1} parent=1 // pred_check_branch
      %42 = sbr.rel (0) target = $region13
    $region12: #{tpu_custom_call.1} parent=1 // pred_region
      _
    $region13: #{tpu_custom_call.1} parent=1 // pred_fallthru
      _
    // Predicated region
    $region14: #{tpu_custom_call.1} parent=1 // pred_check
      _
    $region15: #{tpu_custom_call.1} parent=1 // pred_check_branch
      %44 = sbr.rel (0) target = $region17
    $region16: #{tpu_custom_call.1} parent=1 // pred_region
      _
    $region17: #{tpu_custom_call.1} parent=1 // pred_fallthru
      _
    // Predicated region
    $region18: #{tpu_custom_call.1} parent=1 // pred_check
      _
    $region19: #{tpu_custom_call.1} parent=1 // pred_check_branch
      %46 = sbr.rel (0) target = $region21
    $region20: #{tpu_custom_call.1} parent=1 // pred_region
      _
    $region21: #{tpu_custom_call.1} parent=1 // pred_fallthru
      _
    // Predicated region
    $region22: #{tpu_custom_call.1} parent=1 // pred_check
      _
    $region23: #{tpu_custom_call.1} parent=1 // pred_check_branch
      %48 = sbr.rel (0) target = $region25
    $region24: #{tpu_custom_call.1} parent=1 // pred_region
      %50 = dma.done [#allocation4], 256
    $region25: #{tpu_custom_call.1} parent=1 // pred_fallthru
      _
    // Predicated region
    $region26: #{tpu_custom_call.1} parent=1 // pred_check
      _
    $region27: #{tpu_custom_call.1} parent=1 // pred_check_branch
      %52 = sbr.rel (0) target = $region29
    $region28: #{tpu_custom_call.1} parent=1 // pred_region
      %54 = dma.done [#allocation7], 512
    $region29: #{tpu_custom_call.1} parent=1 // pred_fallthru
      _
    %v55 = vld [vmem:[#allocation6] sm:$0xff]
    %v56 = vld [vmem:[#allocation6 + $0x8] sm:$0xff]
    %v57 = vld [vmem:[#allocation6 + $0x10] sm:$0xff]
    %v58 = vld [vmem:[#allocation6 + $0x18] sm:$0xff]
    %v59 = vld [vmem:[%s2] sm:$0x1]
    %v60 = vld [vmem:[%s3] sm:$0x1]
    %v61 = vld [vmem:[#allocation2] sm:$0x1]
    %v62 = vld [vmem:[#allocation3] sm:$0xff]
    %v63 = vld [vmem:[#allocation3 + $0x8] sm:$0xff]
    %v65 = vperm.slane %v59, 0
    %vm67 = vcmask 261120
    %v69 = vsel %vm67, %v62, 0
    %v72 = vsel %vm67, %v63, 0
    %74 = vmatpush.msra.mxu0 0.0
    %75 = vmatpush.msra.mxu0 0.0
    %76 = vmatpush.msra.mxu0 0.0
    %77 = vmatpush.msra.mxu0 0.0
    %78 = vmatpush.msra.mxu0 0.0
    %79 = vmatpush.msra.mxu0 0.0
    %80 = vmatpush.msra.mxu0 0.0
    %81 = vmatpush.msra.mxu0 0.0
    %82 = vmatpush.msra.mxu0 0.0
    %83 = vmatpush.msra.mxu0 0.0
    %84 = vmatpush.msra.mxu0 0.0
    %85 = vmatpush.msra.mxu0 0.0
    %86 = vmatpush.msra.mxu0 %v58
    %87 = vmatpush.msra.mxu0 %v57
    %88 = vmatpush.msra.mxu0 %v56
    %89 = vmatpush.msra.mxu0 %v55
    %90 = vmatmul.f32.gmra.mxu0 %v69
    %v91 = vpop.f32.mrf.mxu0
    %v92 = vadd.f32 %v65, %v91
    %93 = vmatmul.f32.gmra.mxu0 %v72
    %v94 = vpop.f32.mrf.mxu0
    %v95 = vadd.f32 %v65, %v94
    %96 = vdwg.mxu0
    %v97 = vmax.f32 %v92, 0.0
    %v98 = vmax.f32 %v95, 0.0
    %v100 = vperm.slane %v60, 0
    %v102 = vmul.f32 %v97, %v100
    %v103 = vmul.f32 %v98, %v100
    %vm104 = vcmask 523264
    %v105 = vsel %vm104, %v102, 0.0
    %106 = vadd.xlane.f32.xlu0 %v105
    %v107 = vpop.xlane.xlu0 %106
    %v108 = vsel %vm104, %v103, 0.0
    %109 = vadd.xlane.f32.xlu0 %v108
    %v110 = vpop.xlane.xlu0 %109
    %v112 = vperm.slane %v61, 0
    %v114 = vadd.f32 %v107, %v112
    %v115 = vadd.f32 %v110, %v112
    %v116 = vxor.u32 %v114, 2147483648
    %v117 = vxor.u32 %v115, 2147483648
    %v118 = vmul.f32 %v116, 1.442695
    %v119 = vpow.pop %v118
    %v120 = vmul.f32 %v117, 1.442695
    %v121 = vpow.pop %v120
    %v122 = vadd.f32 %v119, 1.0
    %v123 = vadd.f32 %v121, 1.0
    %v124 = vrcp.pop %v122
    %v125 = vmul.f32 %v122, %v124
    %v126 = vsub.f32 1.0, %v125
    %v127 = vmul.f32 %v124, %v126
    %v128 = vadd.f32 %v124, %v127
    %vm129 = vweird.f32 %v122
    %vm130 = vweird.f32 %v124
    %vm131 = vmor %vm129, %vm130
    %v132 = vsel %vm131, %v124, %v128
    %v133 = vand.u32 2147483647, %v122
    %vm134 = vcmp.eq.f32.partialorder %v133, 8.507059e+37
    %v135 = vand.u32 %v122, 2147483648
    %v136 = vor.u32 1.1754944e-38, %v135
    %v137 = vsel %vm134, %v136, %v132
    %v138 = vmul.f32 1.0, %v137
    %v139 = vrcp.pop %v123
    %v140 = vmul.f32 %v123, %v139
    %v141 = vsub.f32 1.0, %v140
    %v142 = vmul.f32 %v139, %v141
    %v143 = vadd.f32 %v139, %v142
    %vm144 = vweird.f32 %v123
    %vm145 = vweird.f32 %v139
    %vm146 = vmor %vm144, %vm145
    %v147 = vsel %vm146, %v139, %v143
    %v148 = vand.u32 2147483647, %v123
    %vm149 = vcmp.eq.f32.partialorder %v148, 8.507059e+37
    %v150 = vand.u32 %v123, 2147483648
    %v151 = vor.u32 1.1754944e-38, %v150
    %v152 = vsel %vm149, %v151, %v147
    %v153 = vmul.f32 1.0, %v152
    %154 = vxpose.xlu0.b32.start [1/16] %v138, 128
    %155 = vxpose.xlu0.b32.cont [2/16] %v153, 128
    %156 = vxpose.xlu0.b32.cont [3/16] 0.0, 128
    %157 = vxpose.xlu0.b32.cont [4/16] 0.0, 128
    %158 = vxpose.xlu0.b32.cont [5/16] 0.0, 128
    %159 = vxpose.xlu0.b32.cont [6/16] 0.0, 128
    %160 = vxpose.xlu0.b32.cont [7/16] 0.0, 128
    %161 = vxpose.xlu0.b32.cont [8/16] 0.0, 128
    %162 = vxpose.xlu0.b32.cont [9/16] 0.0, 128
    %163 = vxpose.xlu0.b32.cont [10/16] 0.0, 128
    %164 = vxpose.xlu0.b32.cont [11/16] 0.0, 128
    %165 = vxpose.xlu0.b32.cont [12/16] 0.0, 128
    %166 = vxpose.xlu0.b32.cont [13/16] 0.0, 128
    %167 = vxpose.xlu0.b32.cont [14/16] 0.0, 128
    %168 = vxpose.xlu0.b32.cont [15/16] 0.0, 128
    %169 = vxpose.xlu0.b32.end [16/16] 0.0, 128
    %v170 = vpop.trf.xlu0
    %v171 = vpop.trf.xlu0
    %v172 = vpop.trf.xlu0
    %v173 = vpop.trf.xlu0
    %v174 = vpop.trf.xlu0
    %v175 = vpop.trf.xlu0
    %v176 = vpop.trf.xlu0
    %v177 = vpop.trf.xlu0
    %v178 = vpop.trf.xlu0
    %v179 = vpop.trf.xlu0
    %v180 = vpop.trf.xlu0
    %v181 = vpop.trf.xlu0
    %v182 = vpop.trf.xlu0
    %v183 = vpop.trf.xlu0
    %v184 = vpop.trf.xlu0
    %v185 = vpop.trf.xlu0
    %vm186 = vcmask 122880
    %187 = vst.msk [vmem:[#allocation8] sm:$0x1] %vm186, %v170
    // Predicated region
    $region30: #{tpu_custom_call.1} parent=1 // pred_check
      _
    $region31: #{tpu_custom_call.1} parent=1 // pred_check_branch
      %189 = sbr.rel (0) target = $region33
    $region32: #{tpu_custom_call.1} parent=1 // pred_region
      %191 = vsyncadd [#allocation5], 0
      %s193 = sshll.u32 [#allocation8], 4
      %s194 = int_to_ptr.vmem [resolvable:$true] %s193
      %s195 = sshll.u32 %s5, 4
      %s196 = int_to_ptr.hbm [resolvable:$true] %s195
      %198 = dma.vmem_to_hbm [thread:$0]  %s194, 16, %s196, [#allocation5]
    $region33: #{tpu_custom_call.1} parent=1 // pred_fallthru
      _
    // Predicated region
    $region34: #{tpu_custom_call.1} parent=1 // pred_check
      _
    $region35: #{tpu_custom_call.1} parent=1 // pred_check_branch
      %200 = sbr.rel (0) target = $region37
    $region36: #{tpu_custom_call.1} parent=1 // pred_region
      %202 = dma.done [#allocation5], 16
    $region37: #{tpu_custom_call.1} parent=1 // pred_fallthru
      _
    %203 = vsyncpa [#allocation4], 1
    %204 = vsyncpa [#allocation7], 1
    %205 = vsyncpa [#allocation5], 1

</llo_original>
